<compile_context>
chip_gen: v7x
topology: tpu7x:2x2x1
jax: 0.10.0
libtpu: 0.0.40
codegen_flags: <defaults>
</compile_context>

<pallas_src>
import functools
import math

import jax
import jax.numpy as jnp
from jax import lax
from jax.experimental import pallas as pl
from jax.experimental.pallas import tpu as pltpu


def sdpa_kernel(q_ref, k_ref, v_ref, mask_ref, ctx_ref, attn_ref, *,
                scale, compute_dtype, hb, approx_softmax):
    """One (head-group, query-tile) grid step.

    Block shapes:
      q_ref    (hb, tq, d_k)       k_ref   (hb, Sk, d_k)    v_ref (hb, Sk, d_v)
      mask_ref (hb, tq, Sk) int8   ctx_ref (1, tq, hb*d_v)  attn_ref (hb, tq, Sk)
    """
    precision = (lax.Precision.HIGHEST if compute_dtype == jnp.float32
                 else lax.Precision.DEFAULT)

    ctx_parts = []
    for h in range(hb):                        # static unroll over the head block
        # Fold 1/sqrt(d_k) into Q: tq*d_k multiplies instead of tq*Sk on scores.
        q = (q_ref[h] * scale).astype(compute_dtype)            # (tq, d_k)
        k = k_ref[h].astype(compute_dtype)                      # (Sk, d_k)

        # scores = (Q*scale) @ K^T -- contract last dims of both operands so K
        # is consumed in its natural layout (no transpose materialized).
        scores = lax.dot_general(
            q, k, (((1,), (1,)), ((), ())),
            preferred_element_type=jnp.float32,
            precision=precision)                                # (tq, Sk) fp32

        masked = mask_ref[h] != 0                               # (tq, Sk) bool
        scores = jnp.where(masked, jnp.float32(-1e9), scores)

        # Numerically stable softmax in fp32 (matches torch.nn.Softmax).
        m = jnp.max(scores, axis=-1, keepdims=True)
        e = jnp.exp(scores - m)
        denom = jnp.sum(e, axis=-1, keepdims=True)              # (tq, 1)
        if approx_softmax:
            # tq EUP reciprocals + a VPU broadcast-mul instead of tq*Sk divides.
            attn_f32 = e * pl.reciprocal(denom, approx=True)
        else:
            attn_f32 = e / denom                                # exact path

        # Cast once; reuse for both the attn store and the attn@V matmul.
        attn_out = attn_f32.astype(attn_ref.dtype)
        attn_ref[h] = attn_out
        if jnp.dtype(attn_ref.dtype) == jnp.dtype(compute_dtype):
            attn_mm = attn_out
        else:
            attn_mm = attn_f32.astype(compute_dtype)

        v = v_ref[h].astype(compute_dtype)                      # (Sk, d_v)
        ctx_h = jnp.dot(attn_mm, v,
                        preferred_element_type=jnp.float32,
                        precision=precision)                    # (tq, d_v) fp32
        ctx_parts.append(ctx_h.astype(ctx_ref.dtype))

    # Lane-dense context slab: (tq, hb*d_v) is >=128 lanes when d_v < 128,
    # so the output stores are full-vreg (no vst.msk partial stores).
    ctx_ref[0] = ctx_parts[0] if hb == 1 else jnp.concatenate(ctx_parts, axis=-1)


def _pick_head_block(H, d_v):
    """Smallest divisor of H whose fused ctx width hb*d_v reaches 128 lanes."""
    if d_v >= 128:
        return 1
    need = -(-128 // d_v)                      # ceil(128 / d_v)
    for hb in range(1, H + 1):
        if H % hb == 0 and hb >= need:
            return hb
    return H


def _vmem_limit_and_tile(Sq, Sk, d_k, d_v, hb, in_bytes, attn_bytes, ctx_bytes,
                         tq_max):
    """Generation-aware VMEM limit + query-row tile that fits the budget."""
    try:
        info = pltpu.get_tpu_info()            # 64 MiB/TC on v7x, 128 MiB v5e/v6e
        cap = getattr(info, "vmem_capacity_bytes", 128 * 1024 * 1024)
    except Exception:
        cap = 128 * 1024 * 1024
    vmem_limit = min(int(cap * 0.8), 96 * 1024 * 1024)   # ~51 MiB v7x, 96 MiB v5e/v6e
    budget = int(vmem_limit * 0.85)                       # headroom for Mosaic scratch

    def est(tq):
        kv = 2 * hb * Sk * (d_k + d_v) * in_bytes                 # K+V, double-buffered
        per_q = (2 * hb * tq * d_k * in_bytes                     # Q tile
                 + 2 * hb * tq * Sk * 1                           # int8 mask tile
                 + 2 * hb * tq * Sk * attn_bytes                  # attn out tile
                 + 2 * tq * hb * d_v * ctx_bytes                  # ctx out tile
                 + 3 * tq * Sk * 4)                               # fp32 softmax scratch
        return kv + per_q

    tq = Sq if Sq <= tq_max else tq_max
    while tq > 128 and tq % 2 == 0 and est(tq) > budget:
        tq //= 2                                # e.g. 256 -> 128 for long Sk on v7x
    return tq, vmem_limit


def scaled_dot_product_attention(Q, K, V, attn_mask, *, tq_max=256,
                                 compute_dtype=jnp.bfloat16,
                                 attn_dtype=None,
                                 approx_softmax=None,
                                 interpret=False):
    """Q: [B,H,Sq,d_k], K: [B,H,Sk,d_k], V: [B,H,Sk,d_v],
       attn_mask: [B,H,Sq,Sk] (True -> masked).  Returns (context, attn).

    attn is returned in `attn_dtype` (default: compute_dtype, i.e. bf16 on the
    fast path) to halve the dominant O(Sq*Sk) HBM write stream.  Pass
    attn_dtype=jnp.float32 / compute_dtype=jnp.float32 / approx_softmax=False
    for a full-precision result.  For best HBM traffic, feed bf16 Q/K/V from
    the producer (the in-kernel casts then become no-ops).
    """
    B, H, Sq, d_k = Q.shape
    Sk = K.shape[2]
    d_v = V.shape[-1]
    BH = B * H

    if attn_dtype is None:
        attn_dtype = compute_dtype
    if approx_softmax is None:
        approx_softmax = jnp.dtype(compute_dtype) != jnp.dtype(jnp.float32)

    hb = _pick_head_block(H, d_v)              # heads per grid step
    G = H // hb                                # head groups per batch
    BG = B * G

    in_bytes = jnp.dtype(Q.dtype).itemsize
    tq, vmem_limit = _vmem_limit_and_tile(
        Sq, Sk, d_k, d_v, hb, in_bytes,
        jnp.dtype(attn_dtype).itemsize, jnp.dtype(Q.dtype).itemsize, tq_max)
    nq = pl.cdiv(Sq, tq)
    # NOTE: if Sq % tq != 0 the last query tile is padded by Pallas; padded rows
    # produce garbage that is never written back (row-wise softmax does not mix
    # rows), so results stay correct.

    q = Q.reshape(BH, Sq, d_k)
    k = K.reshape(BH, Sk, d_k)
    v = V.reshape(BH, Sk, d_v)
    # int8 mask: 4x fewer HBM/VMEM bytes than int32 on this O(Sq*Sk) stream.
    mask = attn_mask.reshape(BH, Sq, Sk).astype(jnp.int8)

    scale = 1.0 / math.sqrt(d_k)
    kernel = functools.partial(sdpa_kernel, scale=scale,
                               compute_dtype=compute_dtype, hb=hb,
                               approx_softmax=approx_softmax)

    # Megacore: shard the batch*head-group axis; query tiles stay sequential so
    # the full-Sk K/V of a head group is DMA'd by exactly one core.
    dims = ("parallel", "arbitrary") if BG >= 2 else ("arbitrary", "parallel")

    ctx_flat, attn_flat = pl.pallas_call(
        kernel,
        out_shape=(
            jax.ShapeDtypeStruct((BG, Sq, hb * d_v), Q.dtype),   # lane-dense ctx
            jax.ShapeDtypeStruct((BH, Sq, Sk), attn_dtype),
        ),
        grid=(BG, nq),
        in_specs=[
            pl.BlockSpec((hb, tq, d_k), lambda g, i: (g, i, 0)),   # Q tile
            pl.BlockSpec((hb, Sk, d_k), lambda g, i: (g, 0, 0)),   # K (full keys)
            pl.BlockSpec((hb, Sk, d_v), lambda g, i: (g, 0, 0)),   # V (full keys)
            pl.BlockSpec((hb, tq, Sk), lambda g, i: (g, i, 0)),    # mask tile (int8)
        ],
        out_specs=(
            pl.BlockSpec((1, tq, hb * d_v), lambda g, i: (g, i, 0)),  # context slab
            pl.BlockSpec((hb, tq, Sk), lambda g, i: (g, i, 0)),       # attn
        ),
        compiler_params=pltpu.CompilerParams(
            dimension_semantics=dims,
            vmem_limit_bytes=vmem_limit),
        interpret=interpret,
    )(q, k, v, mask)

    # Undo the head-group packing of ctx: (B*G, Sq, hb*d_v) -> (B, H, Sq, d_v).
    ctx = (ctx_flat.reshape(B, G, Sq, hb, d_v)
           .transpose(0, 1, 3, 2, 4)
           .reshape(B, H, Sq, d_v))
    attn = attn_flat.reshape(B, H, Sq, Sk)
    return ctx, attn


if __name__ == "__main__":
    # Small deterministic setup consistent with the module's forward.
    B, H, Sq, Sk, d_k, d_v = 2, 4, 8, 8, 32, 32

    key = jax.random.PRNGKey(0)
    kq, kk, kv, km = jax.random.split(key, 4)
    Q = jax.random.normal(kq, (B, H, Sq, d_k), dtype=jnp.float32)
    K = jax.random.normal(kk, (B, H, Sk, d_k), dtype=jnp.float32)
    V = jax.random.normal(kv, (B, H, Sk, d_v), dtype=jnp.float32)
    attn_mask = jax.random.bernoulli(km, 0.25, (B, H, Sq, Sk))  # True -> mask

    # Pure-JAX fp32 reference (same math as the PyTorch forward).
    scores_ref = jnp.einsum("bhqd,bhkd->bhqk", Q, K,
                            precision=lax.Precision.HIGHEST) / math.sqrt(d_k)
    scores_ref = jnp.where(attn_mask, -1e9, scores_ref)
    attn_ref = jax.nn.softmax(scores_ref, axis=-1)
    ctx_ref = jnp.einsum("bhqk,bhkd->bhqd", attn_ref, V,
                         precision=lax.Precision.HIGHEST)

    # Fast path: bf16 MXU matmuls, fp32 softmax, bf16 attn output, approx recip.
    ctx, attn = scaled_dot_product_attention(Q, K, V, attn_mask)
    ctx, attn = jax.block_until_ready((ctx, attn))
    assert ctx.shape == (B, H, Sq, d_v) and attn.shape == (B, H, Sq, Sk)
    assert jnp.allclose(attn.astype(jnp.float32), attn_ref, atol=5e-2, rtol=5e-2)
    assert jnp.allclose(ctx, ctx_ref, atol=5e-2, rtol=5e-2)

    # Full-precision path for a tight numerical check.
    ctx32, attn32 = scaled_dot_product_attention(
        Q, K, V, attn_mask, compute_dtype=jnp.float32,
        attn_dtype=jnp.float32, approx_softmax=False)
    ctx32, attn32 = jax.block_until_ready((ctx32, attn32))
    assert jnp.allclose(attn32, attn_ref, atol=1e-4, rtol=1e-4)
    assert jnp.allclose(ctx32, ctx_ref, atol=1e-4, rtol=1e-4)

    print("KERNEL_OK")
</pallas_src>

<mosaic_0001>
module attributes {stable_mosaic.version = 11 : i64} {
  func.func @sdpa_kernel(%arg0: i32, %arg1: i32, %arg2: memref<4x8x32xf32, #tpu.memory_space<vmem>>, %arg3: memref<4x8x32xf32, #tpu.memory_space<vmem>>, %arg4: memref<4x8x32xf32, #tpu.memory_space<vmem>>, %arg5: memref<4x8x8xi8, #tpu.memory_space<vmem>>, %arg6: memref<1x8x128xf32, #tpu.memory_space<vmem>>, %arg7: memref<4x8x8xbf16, #tpu.memory_space<vmem>>) attributes {dimension_semantics = [#tpu.dimension_semantics<parallel>, #tpu.dimension_semantics<arbitrary>], iteration_bounds = array<i64: 2, 1>, scalar_prefetch = 0 : i64, scratch_operands = 0 : i64, tpu.core_type = #tpu.core_type<tc>, window_params = [{transform_indices = @transform_0, window_bounds = array<i64: 4, 8, 32>}, {transform_indices = @transform_1, window_bounds = array<i64: 4, 8, 32>}, {transform_indices = @transform_2, window_bounds = array<i64: 4, 8, 32>}, {transform_indices = @transform_3, window_bounds = array<i64: 4, 8, 8>}, {transform_indices = @transform_4, window_bounds = array<i64: 1, 8, 128>}, {transform_indices = @transform_5, window_bounds = array<i64: 4, 8, 8>}]} {
    %c0 = arith.constant 0 : index
    %c0_0 = arith.constant 0 : index
    %c0_1 = arith.constant 0 : index
    %0 = vector.load %arg2[%c0, %c0_0, %c0_1] : memref<4x8x32xf32, #tpu.memory_space<vmem>>, vector<1x8x32xf32>
    %1 = vector.shape_cast %0 : vector<1x8x32xf32> to vector<8x32xf32>
    %cst = arith.constant 0.176776692 : f32
    %2 = vector.broadcast %cst : f32 to vector<8x32xf32>
    %3 = arith.mulf %1, %2 : vector<8x32xf32>
    %4 = arith.truncf %3 : vector<8x32xf32> to vector<8x32xbf16>
    %c0_2 = arith.constant 0 : index
    %c0_3 = arith.constant 0 : index
    %c0_4 = arith.constant 0 : index
    %5 = vector.load %arg3[%c0_2, %c0_3, %c0_4] : memref<4x8x32xf32, #tpu.memory_space<vmem>>, vector<1x8x32xf32>
    %6 = vector.shape_cast %5 : vector<1x8x32xf32> to vector<8x32xf32>
    %7 = arith.truncf %6 : vector<8x32xf32> to vector<8x32xbf16>
    %cst_5 = arith.constant dense<0.000000e+00> : vector<8x8xf32>
    %8 = tpu.matmul %4, %7, %cst_5 {dimension_numbers = #tpu.dot_dimension_numbers<[1], [1], [0], [0], [0, 0, 1, 0], [], []>} : vector<8x32xbf16>, vector<8x32xbf16>, vector<8x8xf32> -> vector<8x8xf32>
    %c0_6 = arith.constant 0 : index
    %c0_7 = arith.constant 0 : index
    %c0_8 = arith.constant 0 : index
    %9 = vector.load %arg5[%c0_6, %c0_7, %c0_8] : memref<4x8x8xi8, #tpu.memory_space<vmem>>, vector<1x8x8xi8>
    %10 = vector.shape_cast %9 : vector<1x8x8xi8> to vector<8x8xi8>
    %c0_i8 = arith.constant 0 : i8
    %11 = vector.broadcast %c0_i8 : i8 to vector<8x8xi8>
    %12 = arith.cmpi ne, %10, %11 : vector<8x8xi8>
    %cst_9 = arith.constant -1.000000e+09 : f32
    %13 = vector.broadcast %cst_9 : f32 to vector<8x8xf32>
    %14 = arith.select %12, %13, %8 : vector<8x8xi1>, vector<8x8xf32>
    %cst_10 = arith.constant dense<0xFF800000> : vector<8xf32>
    %15 = vector.multi_reduction <maximumf>, %14, %cst_10 [1] : vector<8x8xf32> to vector<8xf32>
    %16 = vector.shape_cast %15 : vector<8xf32> to vector<8x1xf32>
    %17 = vector.broadcast %16 : vector<8x1xf32> to vector<8x8xf32>
    %18 = arith.subf %14, %17 : vector<8x8xf32>
    %19 = math.exp %18 : vector<8x8xf32>
    %cst_11 = arith.constant dense<0.000000e+00> : vector<8xf32>
    %20 = vector.multi_reduction <add>, %19, %cst_11 [1] : vector<8x8xf32> to vector<8xf32>
    %21 = vector.shape_cast %20 : vector<8xf32> to vector<8x1xf32>
    %22 = tpu.reciprocal %21 {approx = true} : vector<8x1xf32> -> vector<8x1xf32>
    %23 = vector.broadcast %22 : vector<8x1xf32> to vector<8x8xf32>
    %24 = arith.mulf %19, %23 : vector<8x8xf32>
    %25 = arith.truncf %24 : vector<8x8xf32> to vector<8x8xbf16>
    %c0_12 = arith.constant 0 : index
    %c0_13 = arith.constant 0 : index
    %c0_14 = arith.constant 0 : index
    %26 = vector.load %arg7[%c0_12, %c0_13, %c0_14] : memref<4x8x8xbf16, #tpu.memory_space<vmem>>, vector<1x8x8xbf16>
    %27 = vector.shape_cast %26 : vector<1x8x8xbf16> to vector<8x8xbf16>
    %28 = vector.shape_cast %25 : vector<8x8xbf16> to vector<1x8x8xbf16>
    tpu.vector_store %arg7[%c0_12, %c0_13, %c0_14], %28 {strides = array<i32>} : memref<4x8x8xbf16, #tpu.memory_space<vmem>>, vector<1x8x8xbf16>,
    %c0_15 = arith.constant 0 : index
    %c0_16 = arith.constant 0 : index
    %c0_17 = arith.constant 0 : index
    %29 = vector.load %arg4[%c0_15, %c0_16, %c0_17] : memref<4x8x32xf32, #tpu.memory_space<vmem>>, vector<1x8x32xf32>
    %30 = vector.shape_cast %29 : vector<1x8x32xf32> to vector<8x32xf32>
    %31 = arith.truncf %30 : vector<8x32xf32> to vector<8x32xbf16>
    %cst_18 = arith.constant dense<0.000000e+00> : vector<8x32xf32>
    %32 = tpu.matmul %25, %31, %cst_18 {dimension_numbers = #tpu.dot_dimension_numbers<[1], [0], [0], [1], [0, 0, 1, 1], [], []>} : vector<8x8xbf16>, vector<8x32xbf16>, vector<8x32xf32> -> vector<8x32xf32>
    %c1 = arith.constant 1 : index
    %c0_19 = arith.constant 0 : index
    %c0_20 = arith.constant 0 : index
    %33 = vector.load %arg2[%c1, %c0_19, %c0_20] : memref<4x8x32xf32, #tpu.memory_space<vmem>>, vector<1x8x32xf32>
    %34 = vector.shape_cast %33 : vector<1x8x32xf32> to vector<8x32xf32>
    %cst_21 = arith.constant 0.176776692 : f32
    %35 = vector.broadcast %cst_21 : f32 to vector<8x32xf32>
    %36 = arith.mulf %34, %35 : vector<8x32xf32>
    %37 = arith.truncf %36 : vector<8x32xf32> to vector<8x32xbf16>
    %c1_22 = arith.constant 1 : index
    %c0_23 = arith.constant 0 : index
    %c0_24 = arith.constant 0 : index
    %38 = vector.load %arg3[%c1_22, %c0_23, %c0_24] : memref<4x8x32xf32, #tpu.memory_space<vmem>>, vector<1x8x32xf32>
    %39 = vector.shape_cast %38 : vector<1x8x32xf32> to vector<8x32xf32>
    %40 = arith.truncf %39 : vector<8x32xf32> to vector<8x32xbf16>
    %cst_25 = arith.constant dense<0.000000e+00> : vector<8x8xf32>
    %41 = tpu.matmul %37, %40, %cst_25 {dimension_numbers = #tpu.dot_dimension_numbers<[1], [1], [0], [0], [0, 0, 1, 0], [], []>} : vector<8x32xbf16>, vector<8x32xbf16>, vector<8x8xf32> -> vector<8x8xf32>
    %c1_26 = arith.constant 1 : index
    %c0_27 = arith.constant 0 : index
    %c0_28 = arith.constant 0 : index
    %42 = vector.load %arg5[%c1_26, %c0_27, %c0_28] : memref<4x8x8xi8, #tpu.memory_space<vmem>>, vector<1x8x8xi8>
    %43 = vector.shape_cast %42 : vector<1x8x8xi8> to vector<8x8xi8>
    %c0_i8_29 = arith.constant 0 : i8
    %44 = vector.broadcast %c0_i8_29 : i8 to vector<8x8xi8>
    %45 = arith.cmpi ne, %43, %44 : vector<8x8xi8>
    %cst_30 = arith.constant -1.000000e+09 : f32
    %46 = vector.broadcast %cst_30 : f32 to vector<8x8xf32>
    %47 = arith.select %45, %46, %41 : vector<8x8xi1>, vector<8x8xf32>
    %cst_31 = arith.constant dense<0xFF800000> : vector<8xf32>
    %48 = vector.multi_reduction <maximumf>, %47, %cst_31 [1] : vector<8x8xf32> to vector<8xf32>
    %49 = vector.shape_cast %48 : vector<8xf32> to vector<8x1xf32>
    %50 = vector.broadcast %49 : vector<8x1xf32> to vector<8x8xf32>
    %51 = arith.subf %47, %50 : vector<8x8xf32>
    %52 = math.exp %51 : vector<8x8xf32>
    %cst_32 = arith.constant dense<0.000000e+00> : vector<8xf32>
    %53 = vector.multi_reduction <add>, %52, %cst_32 [1] : vector<8x8xf32> to vector<8xf32>
    %54 = vector.shape_cast %53 : vector<8xf32> to vector<8x1xf32>
    %55 = tpu.reciprocal %54 {approx = true} : vector<8x1xf32> -> vector<8x1xf32>
    %56 = vector.broadcast %55 : vector<8x1xf32> to vector<8x8xf32>
    %57 = arith.mulf %52, %56 : vector<8x8xf32>
    %58 = arith.truncf %57 : vector<8x8xf32> to vector<8x8xbf16>
    %c1_33 = arith.constant 1 : index
    %c0_34 = arith.constant 0 : index
    %c0_35 = arith.constant 0 : index
    %59 = vector.load %arg7[%c1_33, %c0_34, %c0_35] : memref<4x8x8xbf16, #tpu.memory_space<vmem>>, vector<1x8x8xbf16>
    %60 = vector.shape_cast %59 : vector<1x8x8xbf16> to vector<8x8xbf16>
    %61 = vector.shape_cast %58 : vector<8x8xbf16> to vector<1x8x8xbf16>
    tpu.vector_store %arg7[%c1_33, %c0_34, %c0_35], %61 {strides = array<i32>} : memref<4x8x8xbf16, #tpu.memory_space<vmem>>, vector<1x8x8xbf16>,
    %c1_36 = arith.constant 1 : index
    %c0_37 = arith.constant 0 : index
    %c0_38 = arith.constant 0 : index
    %62 = vector.load %arg4[%c1_36, %c0_37, %c0_38] : memref<4x8x32xf32, #tpu.memory_space<vmem>>, vector<1x8x32xf32>
    %63 = vector.shape_cast %62 : vector<1x8x32xf32> to vector<8x32xf32>
    %64 = arith.truncf %63 : vector<8x32xf32> to vector<8x32xbf16>
    %cst_39 = arith.constant dense<0.000000e+00> : vector<8x32xf32>
    %65 = tpu.matmul %58, %64, %cst_39 {dimension_numbers = #tpu.dot_dimension_numbers<[1], [0], [0], [1], [0, 0, 1, 1], [], []>} : vector<8x8xbf16>, vector<8x32xbf16>, vector<8x32xf32> -> vector<8x32xf32>
    %c2 = arith.constant 2 : index
    %c0_40 = arith.constant 0 : index
    %c0_41 = arith.constant 0 : index
    %66 = vector.load %arg2[%c2, %c0_40, %c0_41] : memref<4x8x32xf32, #tpu.memory_space<vmem>>, vector<1x8x32xf32>
    %67 = vector.shape_cast %66 : vector<1x8x32xf32> to vector<8x32xf32>
    %cst_42 = arith.constant 0.176776692 : f32
    %68 = vector.broadcast %cst_42 : f32 to vector<8x32xf32>
    %69 = arith.mulf %67, %68 : vector<8x32xf32>
    %70 = arith.truncf %69 : vector<8x32xf32> to vector<8x32xbf16>
    %c2_43 = arith.constant 2 : index
    %c0_44 = arith.constant 0 : index
    %c0_45 = arith.constant 0 : index
    %71 = vector.load %arg3[%c2_43, %c0_44, %c0_45] : memref<4x8x32xf32, #tpu.memory_space<vmem>>, vector<1x8x32xf32>
    %72 = vector.shape_cast %71 : vector<1x8x32xf32> to vector<8x32xf32>
    %73 = arith.truncf %72 : vector<8x32xf32> to vector<8x32xbf16>
    %cst_46 = arith.constant dense<0.000000e+00> : vector<8x8xf32>
    %74 = tpu.matmul %70, %73, %cst_46 {dimension_numbers = #tpu.dot_dimension_numbers<[1], [1], [0], [0], [0, 0, 1, 0], [], []>} : vector<8x32xbf16>, vector<8x32xbf16>, vector<8x8xf32> -> vector<8x8xf32>
    %c2_47 = arith.constant 2 : index
    %c0_48 = arith.constant 0 : index
    %c0_49 = arith.constant 0 : index
    %75 = vector.load %arg5[%c2_47, %c0_48, %c0_49] : memref<4x8x8xi8, #tpu.memory_space<vmem>>, vector<1x8x8xi8>
    %76 = vector.shape_cast %75 : vector<1x8x8xi8> to vector<8x8xi8>
    %c0_i8_50 = arith.constant 0 : i8
    %77 = vector.broadcast %c0_i8_50 : i8 to vector<8x8xi8>
    %78 = arith.cmpi ne, %76, %77 : vector<8x8xi8>
    %cst_51 = arith.constant -1.000000e+09 : f32
    %79 = vector.broadcast %cst_51 : f32 to vector<8x8xf32>
    %80 = arith.select %78, %79, %74 : vector<8x8xi1>, vector<8x8xf32>
    %cst_52 = arith.constant dense<0xFF800000> : vector<8xf32>
    %81 = vector.multi_reduction <maximumf>, %80, %cst_52 [1] : vector<8x8xf32> to vector<8xf32>
    %82 = vector.shape_cast %81 : vector<8xf32> to vector<8x1xf32>
    %83 = vector.broadcast %82 : vector<8x1xf32> to vector<8x8xf32>
    %84 = arith.subf %80, %83 : vector<8x8xf32>
    %85 = math.exp %84 : vector<8x8xf32>
    %cst_53 = arith.constant dense<0.000000e+00> : vector<8xf32>
    %86 = vector.multi_reduction <add>, %85, %cst_53 [1] : vector<8x8xf32> to vector<8xf32>
    %87 = vector.shape_cast %86 : vector<8xf32> to vector<8x1xf32>
    %88 = tpu.reciprocal %87 {approx = true} : vector<8x1xf32> -> vector<8x1xf32>
    %89 = vector.broadcast %88 : vector<8x1xf32> to vector<8x8xf32>
    %90 = arith.mulf %85, %89 : vector<8x8xf32>
    %91 = arith.truncf %90 : vector<8x8xf32> to vector<8x8xbf16>
    %c2_54 = arith.constant 2 : index
    %c0_55 = arith.constant 0 : index
    %c0_56 = arith.constant 0 : index
    %92 = vector.load %arg7[%c2_54, %c0_55, %c0_56] : memref<4x8x8xbf16, #tpu.memory_space<vmem>>, vector<1x8x8xbf16>
    %93 = vector.shape_cast %92 : vector<1x8x8xbf16> to vector<8x8xbf16>
    %94 = vector.shape_cast %91 : vector<8x8xbf16> to vector<1x8x8xbf16>
    tpu.vector_store %arg7[%c2_54, %c0_55, %c0_56], %94 {strides = array<i32>} : memref<4x8x8xbf16, #tpu.memory_space<vmem>>, vector<1x8x8xbf16>,
    %c2_57 = arith.constant 2 : index
    %c0_58 = arith.constant 0 : index
    %c0_59 = arith.constant 0 : index
    %95 = vector.load %arg4[%c2_57, %c0_58, %c0_59] : memref<4x8x32xf32, #tpu.memory_space<vmem>>, vector<1x8x32xf32>
    %96 = vector.shape_cast %95 : vector<1x8x32xf32> to vector<8x32xf32>
    %97 = arith.truncf %96 : vector<8x32xf32> to vector<8x32xbf16>
    %cst_60 = arith.constant dense<0.000000e+00> : vector<8x32xf32>
    %98 = tpu.matmul %91, %97, %cst_60 {dimension_numbers = #tpu.dot_dimension_numbers<[1], [0], [0], [1], [0, 0, 1, 1], [], []>} : vector<8x8xbf16>, vector<8x32xbf16>, vector<8x32xf32> -> vector<8x32xf32>
    %c3 = arith.constant 3 : index
    %c0_61 = arith.constant 0 : index
    %c0_62 = arith.constant 0 : index
    %99 = vector.load %arg2[%c3, %c0_61, %c0_62] : memref<4x8x32xf32, #tpu.memory_space<vmem>>, vector<1x8x32xf32>
    %100 = vector.shape_cast %99 : vector<1x8x32xf32> to vector<8x32xf32>
    %cst_63 = arith.constant 0.176776692 : f32
    %101 = vector.broadcast %cst_63 : f32 to vector<8x32xf32>
    %102 = arith.mulf %100, %101 : vector<8x32xf32>
    %103 = arith.truncf %102 : vector<8x32xf32> to vector<8x32xbf16>
    %c3_64 = arith.constant 3 : index
    %c0_65 = arith.constant 0 : index
    %c0_66 = arith.constant 0 : index
    %104 = vector.load %arg3[%c3_64, %c0_65, %c0_66] : memref<4x8x32xf32, #tpu.memory_space<vmem>>, vector<1x8x32xf32>
    %105 = vector.shape_cast %104 : vector<1x8x32xf32> to vector<8x32xf32>
    %106 = arith.truncf %105 : vector<8x32xf32> to vector<8x32xbf16>
    %cst_67 = arith.constant dense<0.000000e+00> : vector<8x8xf32>
    %107 = tpu.matmul %103, %106, %cst_67 {dimension_numbers = #tpu.dot_dimension_numbers<[1], [1], [0], [0], [0, 0, 1, 0], [], []>} : vector<8x32xbf16>, vector<8x32xbf16>, vector<8x8xf32> -> vector<8x8xf32>
    %c3_68 = arith.constant 3 : index
    %c0_69 = arith.constant 0 : index
    %c0_70 = arith.constant 0 : index
    %108 = vector.load %arg5[%c3_68, %c0_69, %c0_70] : memref<4x8x8xi8, #tpu.memory_space<vmem>>, vector<1x8x8xi8>
    %109 = vector.shape_cast %108 : vector<1x8x8xi8> to vector<8x8xi8>
    %c0_i8_71 = arith.constant 0 : i8
    %110 = vector.broadcast %c0_i8_71 : i8 to vector<8x8xi8>
    %111 = arith.cmpi ne, %109, %110 : vector<8x8xi8>
    %cst_72 = arith.constant -1.000000e+09 : f32
    %112 = vector.broadcast %cst_72 : f32 to vector<8x8xf32>
    %113 = arith.select %111, %112, %107 : vector<8x8xi1>, vector<8x8xf32>
    %cst_73 = arith.constant dense<0xFF800000> : vector<8xf32>
    %114 = vector.multi_reduction <maximumf>, %113, %cst_73 [1] : vector<8x8xf32> to vector<8xf32>
    %115 = vector.shape_cast %114 : vector<8xf32> to vector<8x1xf32>
    %116 = vector.broadcast %115 : vector<8x1xf32> to vector<8x8xf32>
    %117 = arith.subf %113, %116 : vector<8x8xf32>
    %118 = math.exp %117 : vector<8x8xf32>
    %cst_74 = arith.constant dense<0.000000e+00> : vector<8xf32>
    %119 = vector.multi_reduction <add>, %118, %cst_74 [1] : vector<8x8xf32> to vector<8xf32>
    %120 = vector.shape_cast %119 : vector<8xf32> to vector<8x1xf32>
    %121 = tpu.reciprocal %120 {approx = true} : vector<8x1xf32> -> vector<8x1xf32>
    %122 = vector.broadcast %121 : vector<8x1xf32> to vector<8x8xf32>
    %123 = arith.mulf %118, %122 : vector<8x8xf32>
    %124 = arith.truncf %123 : vector<8x8xf32> to vector<8x8xbf16>
    %c3_75 = arith.constant 3 : index
    %c0_76 = arith.constant 0 : index
    %c0_77 = arith.constant 0 : index
    %125 = vector.load %arg7[%c3_75, %c0_76, %c0_77] : memref<4x8x8xbf16, #tpu.memory_space<vmem>>, vector<1x8x8xbf16>
    %126 = vector.shape_cast %125 : vector<1x8x8xbf16> to vector<8x8xbf16>
    %127 = vector.shape_cast %124 : vector<8x8xbf16> to vector<1x8x8xbf16>
    tpu.vector_store %arg7[%c3_75, %c0_76, %c0_77], %127 {strides = array<i32>} : memref<4x8x8xbf16, #tpu.memory_space<vmem>>, vector<1x8x8xbf16>,
    %c3_78 = arith.constant 3 : index
    %c0_79 = arith.constant 0 : index
    %c0_80 = arith.constant 0 : index
    %128 = vector.load %arg4[%c3_78, %c0_79, %c0_80] : memref<4x8x32xf32, #tpu.memory_space<vmem>>, vector<1x8x32xf32>
    %129 = vector.shape_cast %128 : vector<1x8x32xf32> to vector<8x32xf32>
    %130 = arith.truncf %129 : vector<8x32xf32> to vector<8x32xbf16>
    %cst_81 = arith.constant dense<0.000000e+00> : vector<8x32xf32>
    %131 = tpu.matmul %124, %130, %cst_81 {dimension_numbers = #tpu.dot_dimension_numbers<[1], [0], [0], [1], [0, 0, 1, 1], [], []>} : vector<8x8xbf16>, vector<8x32xbf16>, vector<8x32xf32> -> vector<8x32xf32>
    %132 = tpu.concatenate %32, %65, %98, %131 in 1 : vector<8x32xf32>, vector<8x32xf32>, vector<8x32xf32>, vector<8x32xf32> -> vector<8x128xf32>
    %c0_82 = arith.constant 0 : index
    %c0_83 = arith.constant 0 : index
    %c0_84 = arith.constant 0 : index
    %133 = vector.load %arg6[%c0_82, %c0_83, %c0_84] : memref<1x8x128xf32, #tpu.memory_space<vmem>>, vector<1x8x128xf32>
    %134 = vector.shape_cast %133 : vector<1x8x128xf32> to vector<8x128xf32>
    %135 = vector.shape_cast %132 : vector<8x128xf32> to vector<1x8x128xf32>
    tpu.vector_store %arg6[%c0_82, %c0_83, %c0_84], %135 {strides = array<i32>} : memref<1x8x128xf32, #tpu.memory_space<vmem>>, vector<1x8x128xf32>,
    return
  }
  func.func @transform_0(%arg0: i32, %arg1: i32) -> (i32, i32, i32) {
    %c0_i32 = arith.constant 0 : i32
    %c0_i32_0 = arith.constant 0 : i32
    return %arg0, %arg1, %c0_i32 : i32, i32, i32
  }
  func.func @transform_1(%arg0: i32, %arg1: i32) -> (i32, i32, i32) {
    %c0_i32 = arith.constant 0 : i32
    %c0_i32_0 = arith.constant 0 : i32
    %c0_i32_1 = arith.constant 0 : i32
    return %arg0, %c0_i32, %c0_i32_0 : i32, i32, i32
  }
  func.func @transform_2(%arg0: i32, %arg1: i32) -> (i32, i32, i32) {
    %c0_i32 = arith.constant 0 : i32
    %c0_i32_0 = arith.constant 0 : i32
    %c0_i32_1 = arith.constant 0 : i32
    return %arg0, %c0_i32, %c0_i32_0 : i32, i32, i32
  }
  func.func @transform_3(%arg0: i32, %arg1: i32) -> (i32, i32, i32) {
    %c0_i32 = arith.constant 0 : i32
    %c0_i32_0 = arith.constant 0 : i32
    return %arg0, %arg1, %c0_i32 : i32, i32, i32
  }
  func.func @transform_4(%arg0: i32, %arg1: i32) -> (i32, i32, i32) {
    %c0_i32 = arith.constant 0 : i32
    %c0_i32_0 = arith.constant 0 : i32
    return %arg0, %arg1, %c0_i32 : i32, i32, i32
  }
  func.func @transform_5(%arg0: i32, %arg1: i32) -> (i32, i32, i32) {
    %c0_i32 = arith.constant 0 : i32
    %c0_i32_0 = arith.constant 0 : i32
    return %arg0, %arg1, %c0_i32 : i32, i32, i32
  }
}

</mosaic_0001>

<llo_original>
// kernel: tpu_custom_call.1
$region0: #{tpu_custom_call.1}
  #allocation0 [shape = 'u32[]', space=smem, size = 0x4, offset = 0x4, fixed_abs, tag = 'smem constant byte address 0x4 - core index']
  #allocation1 [shape = 'u32[144,128]{1,0:T(1,128)}', space=vmem, size = 0x12000, scoped, tag = 'internal scratch']
  %s0 = inlined_call_operand.hbm [shape: f32[8,8,32], index: 0, kind: input, shape index: {}]
  %s1 = inlined_call_operand.hbm [shape: f32[8,8,32], index: 1, kind: input, shape index: {}]
  %s2 = inlined_call_operand.hbm [shape: f32[8,8,32], index: 2, kind: input, shape index: {}]
  %s3 = inlined_call_operand.hbm [shape: s8[8,8,8], index: 3, kind: input, shape index: {}]
  %s4 = inlined_call_operand.hbm [shape: f32[2,8,128], index: 4, kind: output, shape index: {0}]
  %s5 = inlined_call_operand.hbm [shape: bf16[8,8,8], index: 5, kind: output, shape index: {1}]
  %6 = xla_tuple %s4, %s5
  %s7 = sld [smem:[#allocation0]]
  $region73: #{tpu_custom_call.1} parent=0
    _
  %s9 = ssub.s32 1, %s7
  %s10 = scalar_select 0, %s9, %s7
  $region1: #{tpu_custom_call.1} parent=0
    #allocation2 [shape = 'u8[32768]{0}', space=vmem, size = 0x8000, scoped, tag = 'input window, operand 0']
    #allocation3 [shape = 's32[2]{0}', space=sflag, size = 0x8, scoped, tag = 'scoped memory for tpu_custom_call.1']
    #allocation4 [shape = 's32[2]{0}', space=sflag, size = 0x8, scoped, tag = 'scoped memory for tpu_custom_call.1']
    #allocation5 [shape = 'u8[32768]{0}', space=vmem, size = 0x8000, scoped, tag = 'input window, operand 1']
    #allocation6 [shape = 's32[2]{0}', space=sflag, size = 0x8, scoped, tag = 'scoped memory for tpu_custom_call.1']
    #allocation7 [shape = 'u8[32768]{0}', space=vmem, size = 0x8000, scoped, tag = 'input window, operand 2']
    #allocation8 [shape = 'u8[8192]{0}', space=vmem, size = 0x2000, scoped, tag = 'input window, operand 3']
    #allocation9 [shape = 's32[2]{0}', space=sflag, size = 0x8, scoped, tag = 'scoped memory for tpu_custom_call.1']
    #allocation10 [shape = 'u8[8192]{0}', space=vmem, size = 0x2000, scoped, tag = 'output window, operand 0']
    #allocation11 [shape = 'u8[16384]{0}', space=vmem, size = 0x4000, scoped, tag = 'output window, operand 1']
    #allocation12 [shape = 's32[2]{0}', space=sflag, size = 0x8, scoped, tag = 'scoped memory for tpu_custom_call.1']
    %11 = vsyncpa [#allocation3], 0
    %s12 = scalar_lea.sflag [#allocation3], 1
    %13 = vsyncpa %s12, 0
    %14 = vsyncpa [#allocation6], 0
    %s15 = scalar_lea.sflag [#allocation6], 1
    %16 = vsyncpa %s15, 0
    %17 = vsyncpa [#allocation9], 0
    %s18 = scalar_lea.sflag [#allocation9], 1
    %19 = vsyncpa %s18, 0
    %20 = vsyncpa [#allocation4], 0
    %s21 = scalar_lea.sflag [#allocation4], 1
    %22 = vsyncpa %s21, 0
    %23 = vsyncpa [#allocation12], 0
    %s24 = scalar_lea.sflag [#allocation12], 1
    %25 = vsyncpa %s24, 0
    loop: start=0, step=1, limit=4
    $region2: #{tpu_custom_call.1} parent=1 // loop_pre_header
      _
    $region3: #{tpu_custom_call.1} parent=1 // loop_header
      %s27 = sphi 0, %s31
      %p28 = scmp.ge.s32.totalorder %s27, 4
      %s34 = sphi 0, %s46
      %s35 = sphi 0, %s42
      %s36 = sphi 0, %s34
      %s37 = sphi 0, %s35
      %s38 = sphi 0, %s36
      %s39 = sphi 0, %s37
      %s51 = sphi 0, %s53
      %s54 = sphi 0, %s51
      %s55 = sphi 0, %s54
      %s71 = sphi 0, %s55
      %s77 = sphi 0, %s79
      %s80 = sphi 0, %s77
      %s81 = sphi 0, %s80
      %s97 = sphi 0, %s81
      %s103 = sphi 0, %s105
      %s106 = sphi 0, %s103
      %s107 = sphi 0, %s106
      %s123 = sphi 0, %s107
      %s131 = sphi 0, %s133
      %s134 = sphi 0, %s131
      %s135 = sphi 0, %s134
      %s151 = sphi 0, %s135
      %s159 = sphi 0, %s161
      %s162 = sphi 0, %s159
      %s163 = sphi 0, %s162
      %s179 = sphi 0, %s163
      %s187 = sphi 0, %s189
      %s190 = sphi 0, %s187
      %s191 = sphi 0, %s190
      %s207 = sphi 0, %s191
    $region4: #{tpu_custom_call.1} parent=1 // loop_header_branch
      %30 = sbr.rel (%p28) target = $region8
    $region5: #{tpu_custom_call.1} parent=1 // loop_body
      %s32 = ssub.s32 %s27, 1
      %s33 = ssub.s32 %s27, 2
      %s40 = sadd.s32 1, %s35
      %p41 = scmp.ge.s32.totalorder %s40, 1
      %s42 = scalar_select %p41, 0, %s40
      %s43 = sadd.s32 1, %s34
      %s44 = scalar_select %p41, %s43, %s34
      %p45 = scmp.ge.s32.totalorder %s44, 2
      %s46 = scalar_select %p45, 0, %s44
      %s47 = ssub.s32 %s34, %s46
      %s48 = ssub.s32 %s35, %s42
      %s49 = sor.u32 %s47, %s48
      %p50 = scmp.eq.s32.totalorder %s49, 0
      %s52 = sadd.s32 %s51, 1
      %s53 = scalar_select %p50, %s51, %s52
      %p56 = pneg %p50
      %p57 = scmp.eq.s32.totalorder %s27, 1
      %p58 = por %p56, %p57
      %p59 = scmp.ne.s32.totalorder %s51, %s54
      %p60 = scmp.eq.s32.totalorder %s27, 0
      %p61 = por %p59, %p60
      %p62 = scmp.ne.s32.totalorder %s51, %s54
      %p63 = scmp.eq.s32.totalorder %s32, 1
      %p64 = por %p62, %p63
      %p65 = scmp.ne.s32.totalorder %s54, %s55
      %p66 = scmp.eq.s32.totalorder %s32, 0
      %p67 = por %p65, %p66
      %p68 = scmp.ne.s32.totalorder %s54, %s55
      %p69 = scmp.eq.s32.totalorder %s33, 1
      %p70 = por %p68, %p69
      %p72 = scmp.ne.s32.totalorder %s55, %s71
      %p73 = scmp.eq.s32.totalorder %s33, 0
      %p74 = por %p72, %p73
      %s75 = ssub.s32 %s34, %s46
      %p76 = scmp.eq.s32.totalorder %s75, 0
      %s78 = sadd.s32 %s77, 1
      %s79 = scalar_select %p76, %s77, %s78
      %p82 = pneg %p76
      %p83 = scmp.eq.s32.totalorder %s27, 1
      %p84 = por %p82, %p83
      %p85 = scmp.ne.s32.totalorder %s77, %s80
      %p86 = scmp.eq.s32.totalorder %s27, 0
      %p87 = por %p85, %p86
      %p88 = scmp.ne.s32.totalorder %s77, %s80
      %p89 = scmp.eq.s32.totalorder %s32, 1
      %p90 = por %p88, %p89
      %p91 = scmp.ne.s32.totalorder %s80, %s81
      %p92 = scmp.eq.s32.totalorder %s32, 0
      %p93 = por %p91, %p92
      %p94 = scmp.ne.s32.totalorder %s80, %s81
      %p95 = scmp.eq.s32.totalorder %s33, 1
      %p96 = por %p94, %p95
      %p98 = scmp.ne.s32.totalorder %s81, %s97
      %p99 = scmp.eq.s32.totalorder %s33, 0
      %p100 = por %p98, %p99
      %s101 = ssub.s32 %s34, %s46
      %p102 = scmp.eq.s32.totalorder %s101, 0
      %s104 = sadd.s32 %s103, 1
      %s105 = scalar_select %p102, %s103, %s104
      %p108 = pneg %p102
      %p109 = scmp.eq.s32.totalorder %s27, 1
      %p110 = por %p108, %p109
      %p111 = scmp.ne.s32.totalorder %s103, %s106
      %p112 = scmp.eq.s32.totalorder %s27, 0
      %p113 = por %p111, %p112
      %p114 = scmp.ne.s32.totalorder %s103, %s106
      %p115 = scmp.eq.s32.totalorder %s32, 1
      %p116 = por %p114, %p115
      %p117 = scmp.ne.s32.totalorder %s106, %s107
      %p118 = scmp.eq.s32.totalorder %s32, 0
      %p119 = por %p117, %p118
      %p120 = scmp.ne.s32.totalorder %s106, %s107
      %p121 = scmp.eq.s32.totalorder %s33, 1
      %p122 = por %p120, %p121
      %p124 = scmp.ne.s32.totalorder %s107, %s123
      %p125 = scmp.eq.s32.totalorder %s33, 0
      %p126 = por %p124, %p125
      %s127 = ssub.s32 %s34, %s46
      %s128 = ssub.s32 %s35, %s42
      %s129 = sor.u32 %s127, %s128
      %p130 = scmp.eq.s32.totalorder %s129, 0
      %s132 = sadd.s32 %s131, 1
      %s133 = scalar_select %p130, %s131, %s132
      %p136 = pneg %p130
      %p137 = scmp.eq.s32.totalorder %s27, 1
      %p138 = por %p136, %p137
      %p139 = scmp.ne.s32.totalorder %s131, %s134
      %p140 = scmp.eq.s32.totalorder %s27, 0
      %p141 = por %p139, %p140
      %p142 = scmp.ne.s32.totalorder %s131, %s134
      %p143 = scmp.eq.s32.totalorder %s32, 1
      %p144 = por %p142, %p143
      %p145 = scmp.ne.s32.totalorder %s134, %s135
      %p146 = scmp.eq.s32.totalorder %s32, 0
      %p147 = por %p145, %p146
      %p148 = scmp.ne.s32.totalorder %s134, %s135
      %p149 = scmp.eq.s32.totalorder %s33, 1
      %p150 = por %p148, %p149
      %p152 = scmp.ne.s32.totalorder %s135, %s151
      %p153 = scmp.eq.s32.totalorder %s33, 0
      %p154 = por %p152, %p153
      %s155 = ssub.s32 %s34, %s46
      %s156 = ssub.s32 %s35, %s42
      %s157 = sor.u32 %s155, %s156
      %p158 = scmp.eq.s32.totalorder %s157, 0
      %s160 = sadd.s32 %s159, 1
      %s161 = scalar_select %p158, %s159, %s160
      %p164 = pneg %p158
      %p165 = scmp.eq.s32.totalorder %s27, 1
      %p166 = por %p164, %p165
      %p167 = scmp.ne.s32.totalorder %s159, %s162
      %p168 = scmp.eq.s32.totalorder %s27, 0
      %p169 = por %p167, %p168
      %p170 = scmp.ne.s32.totalorder %s159, %s162
      %p171 = scmp.eq.s32.totalorder %s32, 1
      %p172 = por %p170, %p171
      %p173 = scmp.ne.s32.totalorder %s162, %s163
      %p174 = scmp.eq.s32.totalorder %s32, 0
      %p175 = por %p173, %p174
      %p176 = scmp.ne.s32.totalorder %s162, %s163
      %p177 = scmp.eq.s32.totalorder %s33, 1
      %p178 = por %p176, %p177
      %p180 = scmp.ne.s32.totalorder %s163, %s179
      %p181 = scmp.eq.s32.totalorder %s33, 0
      %p182 = por %p180, %p181
      %s183 = ssub.s32 %s34, %s46
      %s184 = ssub.s32 %s35, %s42
      %s185 = sor.u32 %s183, %s184
      %p186 = scmp.eq.s32.totalorder %s185, 0
      %s188 = sadd.s32 %s187, 1
      %s189 = scalar_select %p186, %s187, %s188
      %p192 = pneg %p186
      %p193 = scmp.eq.s32.totalorder %s27, 1
      %p194 = por %p192, %p193
      %p195 = scmp.ne.s32.totalorder %s187, %s190
      %p196 = scmp.eq.s32.totalorder %s27, 0
      %p197 = por %p195, %p196
      %p198 = scmp.ne.s32.totalorder %s187, %s190
      %p199 = scmp.eq.s32.totalorder %s32, 1
      %p200 = por %p198, %p199
      %p201 = scmp.ne.s32.totalorder %s190, %s191
      %p202 = scmp.eq.s32.totalorder %s32, 0
      %p203 = por %p201, %p202
      %p204 = scmp.ne.s32.totalorder %s190, %s191
      %p205 = scmp.eq.s32.totalorder %s33, 1
      %p206 = por %p204, %p205
      %p208 = scmp.ne.s32.totalorder %s191, %s207
      %p209 = scmp.eq.s32.totalorder %s33, 0
      %p210 = por %p208, %p209
      %p211 = scmp.le.s32.totalorder 1, %s27
      %p212 = scmp.lt.s32.totalorder %s27, 3
      %p213 = pnand %p211, %p212
      %p214 = pneg %p213
      // Predicated region
      $region9: #{tpu_custom_call.1} parent=5 // pred_check
        _
      $region10: #{tpu_custom_call.1} parent=5 // pred_check_branch
        %216 = sbr.rel (%p213) target = $region12
      $region11: #{tpu_custom_call.1} parent=5 // pred_region
        %s217 = ssub.s32 %s27, 1
      $region12: #{tpu_custom_call.1} parent=5 // pred_fallthru
        _
      %p218 = scmp.lt.s32.totalorder %s27, 2
      // Predicated region
      $region13: #{tpu_custom_call.1} parent=5 // pred_check
        %p219 = pneg %p218
      $region14: #{tpu_custom_call.1} parent=5 // pred_check_branch
        %221 = sbr.rel (%p219) target = $region16
      $region15: #{tpu_custom_call.1} parent=5 // pred_region
        // Predicated region
        $region17: #{tpu_custom_call.1} parent=15 // pred_check
          %p222 = pneg %p61
        $region18: #{tpu_custom_call.1} parent=15 // pred_check_branch
          %224 = sbr.rel (%p222) target = $region20
        $region19: #{tpu_custom_call.1} parent=15 // pred_region
          %s225 = sand.u32 %s51, 1
          %s226 = scalar_lea.sflag [#allocation3], %s225
          %s227 = sand.u32 %s51, 1
          %s228 = smul.addr %s227, 32
          %s229 = scalar_lea.vmem [#allocation2], %s228
          %s230 = smul.u32 4, %s34
          %s232 = ssub.s32 512, 512
          %233 = vsyncadd %s226, %s232
          %s234 = sadd.s32 %s35, %s230
          %s235 = smul.addr %s234, 128
          %s236 = scalar_lea.hbm %s0, %s235
          %s237 = sshll.u32 %s229, 4
          %s238 = int_to_ptr.vmem [resolvable:$true] %s237
          %243 = dma.hbm_to_vmem [thread:$0]  %s236, 512, %s238, %s226, 128, 128, 8
        $region20: #{tpu_custom_call.1} parent=15 // pred_fallthru
          _
        // Predicated region
        $region21: #{tpu_custom_call.1} parent=15 // pred_check
          %p244 = pneg %p87
        $region22: #{tpu_custom_call.1} parent=15 // pred_check_branch
          %246 = sbr.rel (%p244) target = $region24
        $region23: #{tpu_custom_call.1} parent=15 // pred_region
          %s247 = sand.u32 %s27, 1
          %s248 = scalar_lea.sflag [#allocation6], %s247
          %s249 = sand.u32 %s77, 1
          %s250 = smul.addr %s249, 32
          %s251 = scalar_lea.vmem [#allocation5], %s250
          %s252 = smul.u32 4, %s34
          %s254 = ssub.s32 512, 512
          %255 = vsyncadd %s248, %s254
          %s256 = smul.addr %s252, 128
          %s257 = scalar_lea.hbm %s1, %s256
          %s258 = sshll.u32 %s251, 4
          %s259 = int_to_ptr.vmem [resolvable:$true] %s258
          %264 = dma.hbm_to_vmem [thread:$0]  %s257, 512, %s259, %s248, 128, 128, 8
        $region24: #{tpu_custom_call.1} parent=15 // pred_fallthru
          _
        // Predicated region
        $region25: #{tpu_custom_call.1} parent=15 // pred_check
          %p265 = pneg %p113
        $region26: #{tpu_custom_call.1} parent=15 // pred_check_branch
          %267 = sbr.rel (%p265) target = $region28
        $region27: #{tpu_custom_call.1} parent=15 // pred_region
          %s268 = sand.u32 %s27, 1
          %s269 = scalar_lea.sflag [#allocation6], %s268
          %s270 = sand.u32 %s103, 1
          %s271 = smul.addr %s270, 32
          %s272 = scalar_lea.vmem [#allocation7], %s271
          %s273 = smul.u32 4, %s34
          %s275 = ssub.s32 512, 512
          %276 = vsyncadd %s269, %s275
          %s277 = smul.addr %s273, 128
          %s278 = scalar_lea.hbm %s2, %s277
          %s279 = sshll.u32 %s272, 4
          %s280 = int_to_ptr.vmem [resolvable:$true] %s279
          %285 = dma.hbm_to_vmem [thread:$0]  %s278, 512, %s280, %s269, 128, 128, 8
        $region28: #{tpu_custom_call.1} parent=15 // pred_fallthru
          _
        // Predicated region
        $region29: #{tpu_custom_call.1} parent=15 // pred_check
          %p286 = pneg %p141
        $region30: #{tpu_custom_call.1} parent=15 // pred_check_branch
          %288 = sbr.rel (%p286) target = $region32
        $region31: #{tpu_custom_call.1} parent=15 // pred_region
          %s289 = sand.u32 %s131, 1
          %s290 = scalar_lea.sflag [#allocation9], %s289
          %s291 = sand.u32 %s131, 1
          %s292 = smul.addr %s291, 8
          %s293 = scalar_lea.vmem [#allocation8], %s292
          %s294 = smul.u32 4, %s34
          %s296 = ssub.s32 128, 128
          %297 = vsyncadd %s290, %s296
          %s298 = sadd.s32 %s35, %s294
          %s299 = smul.addr %s298, 32
          %s300 = scalar_lea.hbm %s3, %s299
          %s301 = sshll.u32 %s293, 4
          %s302 = int_to_ptr.vmem [resolvable:$true] %s301
          %307 = dma.hbm_to_vmem [thread:$0]  %s300, 128, %s302, %s290, 32, 32, 2
        $region32: #{tpu_custom_call.1} parent=15 // pred_fallthru
          _
      $region16: #{tpu_custom_call.1} parent=5 // pred_fallthru
        _
      %p308 = scmp.le.s32.totalorder 1, %s27
      %p309 = scmp.lt.s32.totalorder %s27, 3
      %p310 = pnand %p308, %p309
      %p311 = pneg %p310
      // Predicated region
      $region33: #{tpu_custom_call.1} parent=5 // pred_check
        _
      $region34: #{tpu_custom_call.1} parent=5 // pred_check_branch
        %313 = sbr.rel (%p310) target = $region36
      $region35: #{tpu_custom_call.1} parent=5 // pred_region
        %s314 = ssub.s32 %s27, 1
        %s315 = sand.u32 %s54, 1
        %s316 = scalar_lea.sflag [#allocation3], %s315
        %s317 = sand.u32 %s54, 1
        %s318 = smul.addr %s317, 32
        %s319 = scalar_lea.vmem [#allocation2], %s318
        // Predicated region
        $region37: #{tpu_custom_call.1} parent=35 // pred_check
          %p320 = pneg %p67
        $region38: #{tpu_custom_call.1} parent=35 // pred_check_branch
          %322 = sbr.rel (%p320) target = $region40
        $region39: #{tpu_custom_call.1} parent=35 // pred_region
          %323 = dma.done %s316, 512
        $region40: #{tpu_custom_call.1} parent=35 // pred_fallthru
          _
        %s324 = sand.u32 %s32, 1
        %s325 = scalar_lea.sflag [#allocation6], %s324
        %s326 = sand.u32 %s80, 1
        %s327 = smul.addr %s326, 32
        %s328 = scalar_lea.vmem [#allocation5], %s327
        // Predicated region
        $region41: #{tpu_custom_call.1} parent=35 // pred_check
          %p329 = pneg %p93
        $region42: #{tpu_custom_call.1} parent=35 // pred_check_branch
          %331 = sbr.rel (%p329) target = $region44
        $region43: #{tpu_custom_call.1} parent=35 // pred_region
          %332 = dma.done %s325, 512
        $region44: #{tpu_custom_call.1} parent=35 // pred_fallthru
          _
        %s333 = sand.u32 %s32, 1
        %s334 = scalar_lea.sflag [#allocation6], %s333
        %s335 = sand.u32 %s106, 1
        %s336 = smul.addr %s335, 32
        %s337 = scalar_lea.vmem [#allocation7], %s336
        // Predicated region
        $region45: #{tpu_custom_call.1} parent=35 // pred_check
          %p338 = pneg %p119
        $region46: #{tpu_custom_call.1} parent=35 // pred_check_branch
          %340 = sbr.rel (%p338) target = $region48
        $region47: #{tpu_custom_call.1} parent=35 // pred_region
          %341 = dma.done %s334, 512
        $region48: #{tpu_custom_call.1} parent=35 // pred_fallthru
          _
        %s342 = sand.u32 %s134, 1
        %s343 = scalar_lea.sflag [#allocation9], %s342
        %s344 = sand.u32 %s134, 1
        %s345 = smul.addr %s344, 8
        %s346 = scalar_lea.vmem [#allocation8], %s345
        // Predicated region
        $region49: #{tpu_custom_call.1} parent=35 // pred_check
          %p347 = pneg %p147
        $region50: #{tpu_custom_call.1} parent=35 // pred_check_branch
          %349 = sbr.rel (%p347) target = $region52
        $region51: #{tpu_custom_call.1} parent=35 // pred_region
          %350 = dma.done %s343, 128
        $region52: #{tpu_custom_call.1} parent=35 // pred_fallthru
          _
        %s351 = sand.u32 %s54, 1
        %s352 = scalar_lea.sflag [#allocation3], %s351
        %s353 = sand.u32 %s54, 1
        %s354 = smul.addr %s353, 32
        %s355 = scalar_lea.vmem [#allocation2], %s354
        %p356 = pneg %p67
        %p357 = pneg %p64
        %s358 = sand.u32 %s32, 1
        %s359 = scalar_lea.sflag [#allocation6], %s358
        %s360 = sand.u32 %s80, 1
        %s361 = smul.addr %s360, 32
        %s362 = scalar_lea.vmem [#allocation5], %s361
        %p363 = pneg %p93
        %p364 = pneg %p90
        %s365 = sand.u32 %s32, 1
        %s366 = scalar_lea.sflag [#allocation6], %s365
        %s367 = sand.u32 %s106, 1
        %s368 = smul.addr %s367, 32
        %s369 = scalar_lea.vmem [#allocation7], %s368
        %p370 = pneg %p119
        %p371 = pneg %p116
        %s372 = sand.u32 %s134, 1
        %s373 = scalar_lea.sflag [#allocation9], %s372
        %s374 = sand.u32 %s134, 1
        %s375 = smul.addr %s374, 8
        %s376 = scalar_lea.vmem [#allocation8], %s375
        %p377 = pneg %p147
        %p378 = pneg %p144
        %p379 = pneg %p175
        %p380 = pneg %p172
        %s381 = sand.u32 %s162, 1
        %s382 = scalar_lea.sflag [#allocation4], %s381
        %s383 = sand.u32 %s162, 1
        %s384 = smul.addr %s383, 8
        %s385 = scalar_lea.vmem [#allocation10], %s384
        %p386 = pneg %p203
        %p387 = pneg %p200
        %s388 = sand.u32 %s190, 1
        %s389 = scalar_lea.sflag [#allocation12], %s388
        %s390 = sand.u32 %s190, 1
        %s391 = smul.addr %s390, 16
        %s392 = scalar_lea.vmem [#allocation11], %s391
        %s393 = smul.u32 4, %s36
        %s394 = smul.u32 4, %s36
        %s395 = smul.u32 4, %s36
        %s396 = smul.u32 4, %s36
        %s397 = smul.u32 4, %s36
        %v401 = vld [vmem:[%s319] sm:$0xff]
        %v402 = vmul.f32 %v401, 0.17677669
        %v403 = vpack.c.bf16 %v402, %v402
        %v404 = vld [vmem:[%s328] sm:$0xff]
        %v405 = vpack.c.bf16 %v404, %v404
        %vm406 = vcmask 261120
        %v408 = vsel %vm406, %v403, 0
        %v411 = vsel %vm406, %v405, 0
        %413 = vmatprep.subr.bf16.mxu0 0
        %414 = vmatpush1.bf16.xpose.msra.mxu0 %v411
        %415 = vmatprep.subr.bf16.mxu0 0
        %416 = vmatpush1.bf16.xpose.msra.mxu0 0
        %417 = vmatprep.subr.bf16.mxu0 0
        %418 = vmatpush1.bf16.xpose.msra.mxu0 0
        %419 = vmatprep.subr.bf16.mxu0 0
        %420 = vmatpush1.bf16.xpose.msra.mxu0 0
        %421 = vmatprep.subr.bf16.mxu0 0
        %422 = vmatpush1.bf16.xpose.msra.mxu0 0
        %423 = vmatprep.subr.bf16.mxu0 0
        %424 = vmatpush1.bf16.xpose.msra.mxu0 0
        %425 = vmatprep.subr.bf16.mxu0 0
        %426 = vmatpush1.bf16.xpose.msra.mxu0 0
        %427 = vmatprep.subr.bf16.mxu0 0
        %428 = vmatpush1.bf16.xpose.msra.mxu0 0
        %429 = vmatprep.subr.bf16.mxu0 0
        %430 = vmatpush1.bf16.xpose.msra.mxu0 0
        %431 = vmatprep.subr.bf16.mxu0 0
        %432 = vmatpush1.bf16.xpose.msra.mxu0 0
        %433 = vmatprep.subr.bf16.mxu0 0
        %434 = vmatpush1.bf16.xpose.msra.mxu0 0
        %435 = vmatprep.subr.bf16.mxu0 0
        %436 = vmatpush1.bf16.xpose.msra.mxu0 0
        %437 = vmatprep.subr.bf16.mxu0 0
        %438 = vmatpush1.bf16.xpose.msra.mxu0 0
        %439 = vmatprep.subr.bf16.mxu0 0
        %440 = vmatpush1.bf16.xpose.msra.mxu0 0
        %441 = vmatprep.subr.bf16.mxu0 0
        %442 = vmatpush1.bf16.xpose.msra.mxu0 0
        %443 = vmatprep.subr.bf16.mxu0 0
        %444 = vmatpush1.bf16.xpose.msra.mxu0 0
        %445 = vmatprep.mubr.bf16.mxu0 0
        %446 = vmatmul.mubr.bf16.gmra.mrb[0].mxu0 %v408
        %v447 = vpop.f32.mrb[0].mxu0
        %v448 = vadd.f32 0.0, %v447
        %v449 = vpop.f32.mrb[0].mxu0
        %v450 = vpop.f32.mrb[0].mxu0
        %v451 = vpop.f32.mrb[0].mxu0
        %452 = vdwg.mxu0
        %v453 = vld [vmem:[%s346] sm:$0x3]
        %vm454 = vnez %v453
        %v455 = vsel %vm454, 16843009, 0
        %v456 = vunpack.c.0.s8 %v455
        %vm457 = vcmp.ne.s32.totalorder %v456, 0
        %v458 = vsel %vm457, -1e+09, %v448
        %vm459 = vcmask 64512
        %v460 = vsel %vm459, %v458, -inf
        %461 = vmax.xlane.f32.xlu0 %v460
        %v462 = vpop.xlane.xlu0 %461
        %v463 = vsub.f32 %v458, %v462
        %v464 = vmul.f32 %v463, 1.442695
        %v465 = vpow.pop %v464
        %v466 = vsel %vm459, %v465, 0.0
        %467 = vadd.xlane.f32.xlu0 %v466
        %v468 = vpop.xlane.xlu0 %467
        %v469 = vrcp.pop %v468
        %v470 = vmul.f32 %v465, %v469
        %v471 = vpack.c.bf16 %v470, %v470
        %vm472 = vcmask 60416
        %473 = vst.msk [vmem:[%s392] sm:$0xf] %vm472, %v471
        %v474 = vld [vmem:[%s337] sm:$0xff]
        %v475 = vpack.c.bf16 %v474, %v474
        %v477 = vsel %vm459, %v471, 0
        %vm479 = vcmask 1043456
        %v481 = vsel %vm479, %v475, 0
        %483 = vmatprep.subr.bf16.mxu0 0
        %484 = vmatpush1.bf16.msra.mxu0 %v481
        %485 = vmatprep.subr.bf16.mxu0 0
        %486 = vmatpush1.bf16.msra.mxu0 0
        %487 = vmatprep.subr.bf16.mxu0 0
        %488 = vmatpush1.bf16.msra.mxu0 0
        %489 = vmatprep.subr.bf16.mxu0 0
        %490 = vmatpush1.bf16.msra.mxu0 0
        %491 = vmatprep.subr.bf16.mxu0 0
        %492 = vmatpush1.bf16.msra.mxu0 0
        %493 = vmatprep.subr.bf16.mxu0 0
        %494 = vmatpush1.bf16.msra.mxu0 0
        %495 = vmatprep.subr.bf16.mxu0 0
        %496 = vmatpush1.bf16.msra.mxu0 0
        %497 = vmatprep.subr.bf16.mxu0 0
        %498 = vmatpush1.bf16.msra.mxu0 0
        %499 = vmatprep.subr.bf16.mxu0 0
        %500 = vmatpush1.bf16.msra.mxu0 0
        %501 = vmatprep.subr.bf16.mxu0 0
        %502 = vmatpush1.bf16.msra.mxu0 0
        %503 = vmatprep.subr.bf16.mxu0 0
        %504 = vmatpush1.bf16.msra.mxu0 0
        %505 = vmatprep.subr.bf16.mxu0 0
        %506 = vmatpush1.bf16.msra.mxu0 0
        %507 = vmatprep.subr.bf16.mxu0 0
        %508 = vmatpush1.bf16.msra.mxu0 0
        %509 = vmatprep.subr.bf16.mxu0 0
        %510 = vmatpush1.bf16.msra.mxu0 0
        %511 = vmatprep.subr.bf16.mxu0 0
        %512 = vmatpush1.bf16.msra.mxu0 0
        %513 = vmatprep.subr.bf16.mxu0 0
        %514 = vmatpush1.bf16.msra.mxu0 0
        %515 = vmatprep.mubr.bf16.mxu0 0
        %516 = vmatmul.mubr.bf16.gmra.mrb[0].mxu0 %v477
        %v517 = vpop.f32.mrb[0].mxu0
        %v518 = vadd.f32 0.0, %v517
        %v519 = vpop.f32.mrb[0].mxu0
        %v520 = vpop.f32.mrb[0].mxu0
        %v521 = vpop.f32.mrb[0].mxu0
        %522 = vdwg.mxu0
        %s523 = scalar_lea.vmem %s319, 8 [#allocation2]
        %v524 = vld [vmem:[%s523] sm:$0xff]
        %v525 = vmul.f32 %v524, 0.17677669
        %v526 = vpack.c.bf16 %v525, %v525
        %s527 = scalar_lea.vmem %s328, 8 [#allocation5]
        %v528 = vld [vmem:[%s527] sm:$0xff]
        %v529 = vpack.c.bf16 %v528, %v528
        %v531 = vsel %vm406, %v526, 0
        %v534 = vsel %vm406, %v529, 0
        %536 = vmatprep.subr.bf16.mxu0 0
        %537 = vmatpush1.bf16.xpose.msra.mxu0 %v534
        %538 = vmatprep.subr.bf16.mxu0 0
        %539 = vmatpush1.bf16.xpose.msra.mxu0 0
        %540 = vmatprep.subr.bf16.mxu0 0
        %541 = vmatpush1.bf16.xpose.msra.mxu0 0
        %542 = vmatprep.subr.bf16.mxu0 0
        %543 = vmatpush1.bf16.xpose.msra.mxu0 0
        %544 = vmatprep.subr.bf16.mxu0 0
        %545 = vmatpush1.bf16.xpose.msra.mxu0 0
        %546 = vmatprep.subr.bf16.mxu0 0
        %547 = vmatpush1.bf16.xpose.msra.mxu0 0
        %548 = vmatprep.subr.bf16.mxu0 0
        %549 = vmatpush1.bf16.xpose.msra.mxu0 0
        %550 = vmatprep.subr.bf16.mxu0 0
        %551 = vmatpush1.bf16.xpose.msra.mxu0 0
        %552 = vmatprep.subr.bf16.mxu0 0
        %553 = vmatpush1.bf16.xpose.msra.mxu0 0
        %554 = vmatprep.subr.bf16.mxu0 0
        %555 = vmatpush1.bf16.xpose.msra.mxu0 0
        %556 = vmatprep.subr.bf16.mxu0 0
        %557 = vmatpush1.bf16.xpose.msra.mxu0 0
        %558 = vmatprep.subr.bf16.mxu0 0
        %559 = vmatpush1.bf16.xpose.msra.mxu0 0
        %560 = vmatprep.subr.bf16.mxu0 0
        %561 = vmatpush1.bf16.xpose.msra.mxu0 0
        %562 = vmatprep.subr.bf16.mxu0 0
        %563 = vmatpush1.bf16.xpose.msra.mxu0 0
        %564 = vmatprep.subr.bf16.mxu0 0
        %565 = vmatpush1.bf16.xpose.msra.mxu0 0
        %566 = vmatprep.subr.bf16.mxu0 0
        %567 = vmatpush1.bf16.xpose.msra.mxu0 0
        %568 = vmatprep.mubr.bf16.mxu0 0
        %569 = vmatmul.mubr.bf16.gmra.mrb[0].mxu0 %v531
        %v570 = vpop.f32.mrb[0].mxu0
        %v571 = vadd.f32 0.0, %v570
        %v572 = vpop.f32.mrb[0].mxu0
        %v573 = vpop.f32.mrb[0].mxu0
        %v574 = vpop.f32.mrb[0].mxu0
        %575 = vdwg.mxu0
        %s576 = scalar_lea.vmem %s346, 2 [#allocation8]
        %v577 = vld [vmem:[%s576] sm:$0x3]
        %vm578 = vnez %v577
        %v579 = vsel %vm578, 16843009, 0
        %v580 = vunpack.c.0.s8 %v579
        %vm581 = vcmp.ne.s32.totalorder %v580, 0
        %v582 = vsel %vm581, -1e+09, %v571
        %v583 = vsel %vm459, %v582, -inf
        %584 = vmax.xlane.f32.xlu0 %v583
        %v585 = vpop.xlane.xlu0 %584
        %v586 = vsub.f32 %v582, %v585
        %v587 = vmul.f32 %v586, 1.442695
        %v588 = vpow.pop %v587
        %v589 = vsel %vm459, %v588, 0.0
        %590 = vadd.xlane.f32.xlu0 %v589
        %v591 = vpop.xlane.xlu0 %590
        %v592 = vrcp.pop %v591
        %v593 = vmul.f32 %v588, %v592
        %v594 = vpack.c.bf16 %v593, %v593
        %s595 = scalar_lea.vmem %s392, 4 [#allocation11]
        %596 = vst.msk [vmem:[%s595] sm:$0xf] %vm472, %v594
        %s597 = scalar_lea.vmem %s337, 8 [#allocation7]
        %v598 = vld [vmem:[%s597] sm:$0xff]
        %v599 = vpack.c.bf16 %v598, %v598
        %v601 = vsel %vm459, %v594, 0
        %v604 = vsel %vm479, %v599, 0
        %606 = vmatprep.subr.bf16.mxu0 0
        %607 = vmatpush1.bf16.msra.mxu0 %v604
        %608 = vmatprep.subr.bf16.mxu0 0
        %609 = vmatpush1.bf16.msra.mxu0 0
        %610 = vmatprep.subr.bf16.mxu0 0
        %611 = vmatpush1.bf16.msra.mxu0 0
        %612 = vmatprep.subr.bf16.mxu0 0
        %613 = vmatpush1.bf16.msra.mxu0 0
        %614 = vmatprep.subr.bf16.mxu0 0
        %615 = vmatpush1.bf16.msra.mxu0 0
        %616 = vmatprep.subr.bf16.mxu0 0
        %617 = vmatpush1.bf16.msra.mxu0 0
        %618 = vmatprep.subr.bf16.mxu0 0
        %619 = vmatpush1.bf16.msra.mxu0 0
        %620 = vmatprep.subr.bf16.mxu0 0
        %621 = vmatpush1.bf16.msra.mxu0 0
        %622 = vmatprep.subr.bf16.mxu0 0
        %623 = vmatpush1.bf16.msra.mxu0 0
        %624 = vmatprep.subr.bf16.mxu0 0
        %625 = vmatpush1.bf16.msra.mxu0 0
        %626 = vmatprep.subr.bf16.mxu0 0
        %627 = vmatpush1.bf16.msra.mxu0 0
        %628 = vmatprep.subr.bf16.mxu0 0
        %629 = vmatpush1.bf16.msra.mxu0 0
        %630 = vmatprep.subr.bf16.mxu0 0
        %631 = vmatpush1.bf16.msra.mxu0 0
        %632 = vmatprep.subr.bf16.mxu0 0
        %633 = vmatpush1.bf16.msra.mxu0 0
        %634 = vmatprep.subr.bf16.mxu0 0
        %635 = vmatpush1.bf16.msra.mxu0 0
        %636 = vmatprep.subr.bf16.mxu0 0
        %637 = vmatpush1.bf16.msra.mxu0 0
        %638 = vmatprep.mubr.bf16.mxu0 0
        %639 = vmatmul.mubr.bf16.gmra.mrb[0].mxu0 %v601
        %v640 = vpop.f32.mrb[0].mxu0
        %v641 = vadd.f32 0.0, %v640
        %v642 = vpop.f32.mrb[0].mxu0
        %v643 = vpop.f32.mrb[0].mxu0
        %v644 = vpop.f32.mrb[0].mxu0
        %645 = vdwg.mxu0
        %s646 = scalar_lea.vmem %s319, 16 [#allocation2]
        %v647 = vld [vmem:[%s646] sm:$0xff]
        %v648 = vmul.f32 %v647, 0.17677669
        %v649 = vpack.c.bf16 %v648, %v648
        %s650 = scalar_lea.vmem %s328, 16 [#allocation5]
        %v651 = vld [vmem:[%s650] sm:$0xff]
        %v652 = vpack.c.bf16 %v651, %v651
        %v654 = vsel %vm406, %v649, 0
        %v657 = vsel %vm406, %v652, 0
        %659 = vmatprep.subr.bf16.mxu0 0
        %660 = vmatpush1.bf16.xpose.msra.mxu0 %v657
        %661 = vmatprep.subr.bf16.mxu0 0
        %662 = vmatpush1.bf16.xpose.msra.mxu0 0
        %663 = vmatprep.subr.bf16.mxu0 0
        %664 = vmatpush1.bf16.xpose.msra.mxu0 0
        %665 = vmatprep.subr.bf16.mxu0 0
        %666 = vmatpush1.bf16.xpose.msra.mxu0 0
        %667 = vmatprep.subr.bf16.mxu0 0
        %668 = vmatpush1.bf16.xpose.msra.mxu0 0
        %669 = vmatprep.subr.bf16.mxu0 0
        %670 = vmatpush1.bf16.xpose.msra.mxu0 0
        %671 = vmatprep.subr.bf16.mxu0 0
        %672 = vmatpush1.bf16.xpose.msra.mxu0 0
        %673 = vmatprep.subr.bf16.mxu0 0
        %674 = vmatpush1.bf16.xpose.msra.mxu0 0
        %675 = vmatprep.subr.bf16.mxu0 0
        %676 = vmatpush1.bf16.xpose.msra.mxu0 0
        %677 = vmatprep.subr.bf16.mxu0 0
        %678 = vmatpush1.bf16.xpose.msra.mxu0 0
        %679 = vmatprep.subr.bf16.mxu0 0
        %680 = vmatpush1.bf16.xpose.msra.mxu0 0
        %681 = vmatprep.subr.bf16.mxu0 0
        %682 = vmatpush1.bf16.xpose.msra.mxu0 0
        %683 = vmatprep.subr.bf16.mxu0 0
        %684 = vmatpush1.bf16.xpose.msra.mxu0 0
        %685 = vmatprep.subr.bf16.mxu0 0
        %686 = vmatpush1.bf16.xpose.msra.mxu0 0
        %687 = vmatprep.subr.bf16.mxu0 0
        %688 = vmatpush1.bf16.xpose.msra.mxu0 0
        %689 = vmatprep.subr.bf16.mxu0 0
        %690 = vmatpush1.bf16.xpose.msra.mxu0 0
        %691 = vmatprep.mubr.bf16.mxu0 0
        %692 = vmatmul.mubr.bf16.gmra.mrb[0].mxu0 %v654
        %v693 = vpop.f32.mrb[0].mxu0
        %v694 = vadd.f32 0.0, %v693
        %v695 = vpop.f32.mrb[0].mxu0
        %v696 = vpop.f32.mrb[0].mxu0
        %v697 = vpop.f32.mrb[0].mxu0
        %698 = vdwg.mxu0
        %s699 = scalar_lea.vmem %s346, 4 [#allocation8]
        %v700 = vld [vmem:[%s699] sm:$0x3]
        %vm701 = vnez %v700
        %v702 = vsel %vm701, 16843009, 0
        %v703 = vunpack.c.0.s8 %v702
        %vm704 = vcmp.ne.s32.totalorder %v703, 0
        %v705 = vsel %vm704, -1e+09, %v694
        %v706 = vsel %vm459, %v705, -inf
        %707 = vmax.xlane.f32.xlu0 %v706
        %v708 = vpop.xlane.xlu0 %707
        %v709 = vsub.f32 %v705, %v708
        %v710 = vmul.f32 %v709, 1.442695
        %v711 = vpow.pop %v710
        %v712 = vsel %vm459, %v711, 0.0
        %713 = vadd.xlane.f32.xlu0 %v712
        %v714 = vpop.xlane.xlu0 %713
        %v715 = vrcp.pop %v714
        %v716 = vmul.f32 %v711, %v715
        %v717 = vpack.c.bf16 %v716, %v716
        %s718 = scalar_lea.vmem %s392, 8 [#allocation11]
        %719 = vst.msk [vmem:[%s718] sm:$0xf] %vm472, %v717
        %s720 = scalar_lea.vmem %s337, 16 [#allocation7]
        %v721 = vld [vmem:[%s720] sm:$0xff]
        %v722 = vpack.c.bf16 %v721, %v721
        %v724 = vsel %vm459, %v717, 0
        %v727 = vsel %vm479, %v722, 0
        %729 = vmatprep.subr.bf16.mxu0 0
        %730 = vmatpush1.bf16.msra.mxu0 %v727
        %731 = vmatprep.subr.bf16.mxu0 0
        %732 = vmatpush1.bf16.msra.mxu0 0
        %733 = vmatprep.subr.bf16.mxu0 0
        %734 = vmatpush1.bf16.msra.mxu0 0
        %735 = vmatprep.subr.bf16.mxu0 0
        %736 = vmatpush1.bf16.msra.mxu0 0
        %737 = vmatprep.subr.bf16.mxu0 0
        %738 = vmatpush1.bf16.msra.mxu0 0
        %739 = vmatprep.subr.bf16.mxu0 0
        %740 = vmatpush1.bf16.msra.mxu0 0
        %741 = vmatprep.subr.bf16.mxu0 0
        %742 = vmatpush1.bf16.msra.mxu0 0
        %743 = vmatprep.subr.bf16.mxu0 0
        %744 = vmatpush1.bf16.msra.mxu0 0
        %745 = vmatprep.subr.bf16.mxu0 0
        %746 = vmatpush1.bf16.msra.mxu0 0
        %747 = vmatprep.subr.bf16.mxu0 0
        %748 = vmatpush1.bf16.msra.mxu0 0
        %749 = vmatprep.subr.bf16.mxu0 0
        %750 = vmatpush1.bf16.msra.mxu0 0
        %751 = vmatprep.subr.bf16.mxu0 0
        %752 = vmatpush1.bf16.msra.mxu0 0
        %753 = vmatprep.subr.bf16.mxu0 0
        %754 = vmatpush1.bf16.msra.mxu0 0
        %755 = vmatprep.subr.bf16.mxu0 0
        %756 = vmatpush1.bf16.msra.mxu0 0
        %757 = vmatprep.subr.bf16.mxu0 0
        %758 = vmatpush1.bf16.msra.mxu0 0
        %759 = vmatprep.subr.bf16.mxu0 0
        %760 = vmatpush1.bf16.msra.mxu0 0
        %761 = vmatprep.mubr.bf16.mxu0 0
        %762 = vmatmul.mubr.bf16.gmra.mrb[0].mxu0 %v724
        %v763 = vpop.f32.mrb[0].mxu0
        %v764 = vadd.f32 0.0, %v763
        %v765 = vpop.f32.mrb[0].mxu0
        %v766 = vpop.f32.mrb[0].mxu0
        %v767 = vpop.f32.mrb[0].mxu0
        %768 = vdwg.mxu0
        %s769 = scalar_lea.vmem %s319, 24 [#allocation2]
        %v770 = vld [vmem:[%s769] sm:$0xff]
        %v771 = vmul.f32 %v770, 0.17677669
        %v772 = vpack.c.bf16 %v771, %v771
        %s773 = scalar_lea.vmem %s328, 24 [#allocation5]
        %v774 = vld [vmem:[%s773] sm:$0xff]
        %v775 = vpack.c.bf16 %v774, %v774
        %v777 = vsel %vm406, %v772, 0
        %v780 = vsel %vm406, %v775, 0
        %782 = vmatprep.subr.bf16.mxu0 0
        %783 = vmatpush1.bf16.xpose.msra.mxu0 %v780
        %784 = vmatprep.subr.bf16.mxu0 0
        %785 = vmatpush1.bf16.xpose.msra.mxu0 0
        %786 = vmatprep.subr.bf16.mxu0 0
        %787 = vmatpush1.bf16.xpose.msra.mxu0 0
        %788 = vmatprep.subr.bf16.mxu0 0
        %789 = vmatpush1.bf16.xpose.msra.mxu0 0
        %790 = vmatprep.subr.bf16.mxu0 0
        %791 = vmatpush1.bf16.xpose.msra.mxu0 0
        %792 = vmatprep.subr.bf16.mxu0 0
        %793 = vmatpush1.bf16.xpose.msra.mxu0 0
        %794 = vmatprep.subr.bf16.mxu0 0
        %795 = vmatpush1.bf16.xpose.msra.mxu0 0
        %796 = vmatprep.subr.bf16.mxu0 0
        %797 = vmatpush1.bf16.xpose.msra.mxu0 0
        %798 = vmatprep.subr.bf16.mxu0 0
        %799 = vmatpush1.bf16.xpose.msra.mxu0 0
        %800 = vmatprep.subr.bf16.mxu0 0
        %801 = vmatpush1.bf16.xpose.msra.mxu0 0
        %802 = vmatprep.subr.bf16.mxu0 0
        %803 = vmatpush1.bf16.xpose.msra.mxu0 0
        %804 = vmatprep.subr.bf16.mxu0 0
        %805 = vmatpush1.bf16.xpose.msra.mxu0 0
        %806 = vmatprep.subr.bf16.mxu0 0
        %807 = vmatpush1.bf16.xpose.msra.mxu0 0
        %808 = vmatprep.subr.bf16.mxu0 0
        %809 = vmatpush1.bf16.xpose.msra.mxu0 0
        %810 = vmatprep.subr.bf16.mxu0 0
        %811 = vmatpush1.bf16.xpose.msra.mxu0 0
        %812 = vmatprep.subr.bf16.mxu0 0
        %813 = vmatpush1.bf16.xpose.msra.mxu0 0
        %814 = vmatprep.mubr.bf16.mxu0 0
        %815 = vmatmul.mubr.bf16.gmra.mrb[0].mxu0 %v777
        %v816 = vpop.f32.mrb[0].mxu0
        %v817 = vadd.f32 0.0, %v816
        %v818 = vpop.f32.mrb[0].mxu0
        %v819 = vpop.f32.mrb[0].mxu0
        %v820 = vpop.f32.mrb[0].mxu0
        %821 = vdwg.mxu0
        %s822 = scalar_lea.vmem %s346, 6 [#allocation8]
        %v823 = vld [vmem:[%s822] sm:$0x3]
        %vm824 = vnez %v823
        %v825 = vsel %vm824, 16843009, 0
        %v826 = vunpack.c.0.s8 %v825
        %vm827 = vcmp.ne.s32.totalorder %v826, 0
        %v828 = vsel %vm827, -1e+09, %v817
        %v829 = vsel %vm459, %v828, -inf
        %830 = vmax.xlane.f32.xlu0 %v829
        %v831 = vpop.xlane.xlu0 %830
        %v832 = vsub.f32 %v828, %v831
        %v833 = vmul.f32 %v832, 1.442695
        %v834 = vpow.pop %v833
        %v835 = vsel %vm459, %v834, 0.0
        %836 = vadd.xlane.f32.xlu0 %v835
        %v837 = vpop.xlane.xlu0 %836
        %v838 = vrcp.pop %v837
        %v839 = vmul.f32 %v834, %v838
        %v840 = vpack.c.bf16 %v839, %v839
        %s841 = scalar_lea.vmem %s392, 12 [#allocation11]
        %842 = vst.msk [vmem:[%s841] sm:$0xf] %vm472, %v840
        %s843 = scalar_lea.vmem %s337, 24 [#allocation7]
        %v844 = vld [vmem:[%s843] sm:$0xff]
        %v845 = vpack.c.bf16 %v844, %v844
        %v847 = vsel %vm459, %v840, 0
        %v850 = vsel %vm479, %v845, 0
        %852 = vmatprep.subr.bf16.mxu0 0
        %853 = vmatpush1.bf16.msra.mxu0 %v850
        %854 = vmatprep.subr.bf16.mxu0 0
        %855 = vmatpush1.bf16.msra.mxu0 0
        %856 = vmatprep.subr.bf16.mxu0 0
        %857 = vmatpush1.bf16.msra.mxu0 0
        %858 = vmatprep.subr.bf16.mxu0 0
        %859 = vmatpush1.bf16.msra.mxu0 0
        %860 = vmatprep.subr.bf16.mxu0 0
        %861 = vmatpush1.bf16.msra.mxu0 0
        %862 = vmatprep.subr.bf16.mxu0 0
        %863 = vmatpush1.bf16.msra.mxu0 0
        %864 = vmatprep.subr.bf16.mxu0 0
        %865 = vmatpush1.bf16.msra.mxu0 0
        %866 = vmatprep.subr.bf16.mxu0 0
        %867 = vmatpush1.bf16.msra.mxu0 0
        %868 = vmatprep.subr.bf16.mxu0 0
        %869 = vmatpush1.bf16.msra.mxu0 0
        %870 = vmatprep.subr.bf16.mxu0 0
        %871 = vmatpush1.bf16.msra.mxu0 0
        %872 = vmatprep.subr.bf16.mxu0 0
        %873 = vmatpush1.bf16.msra.mxu0 0
        %874 = vmatprep.subr.bf16.mxu0 0
        %875 = vmatpush1.bf16.msra.mxu0 0
        %876 = vmatprep.subr.bf16.mxu0 0
        %877 = vmatpush1.bf16.msra.mxu0 0
        %878 = vmatprep.subr.bf16.mxu0 0
        %879 = vmatpush1.bf16.msra.mxu0 0
        %880 = vmatprep.subr.bf16.mxu0 0
        %881 = vmatpush1.bf16.msra.mxu0 0
        %882 = vmatprep.subr.bf16.mxu0 0
        %883 = vmatpush1.bf16.msra.mxu0 0
        %884 = vmatprep.mubr.bf16.mxu0 0
        %885 = vmatmul.mubr.bf16.gmra.mrb[0].mxu0 %v847
        %v886 = vpop.f32.mrb[0].mxu0
        %v887 = vadd.f32 0.0, %v886
        %v888 = vpop.f32.mrb[0].mxu0
        %v889 = vpop.f32.mrb[0].mxu0
        %v890 = vpop.f32.mrb[0].mxu0
        %891 = vdwg.mxu0
        %893 = vrot.lane.b32.xlu0 %v641, 32
        %v894 = vpop.permute.xlu0 %893
        %897 = vrot.lane.b32.xlu0 %v764, 64
        %v898 = vpop.permute.xlu0 %897
        %901 = vrot.lane.b32.xlu0 %v887, 96
        %v902 = vpop.permute.xlu0 %901
        %v904 = vsel %vm406, %v518, %v894
        %vm905 = vcmask 523264
        %v906 = vsel %vm905, %v904, %v898
        %vm907 = vcmask 785408
        %v908 = vsel %vm907, %v906, %v902
        %909 = vst [vmem:[%s385] sm:$0xff] %v908
        %s910 = sand.u32 %s162, 1
        %s911 = scalar_lea.sflag [#allocation4], %s910
        %s912 = sand.u32 %s162, 1
        %s913 = smul.addr %s912, 8
        %s914 = scalar_lea.vmem [#allocation10], %s913
        %s915 = sand.u32 %s190, 1
        %s916 = scalar_lea.sflag [#allocation12], %s915
        %s917 = sand.u32 %s190, 1
        %s918 = smul.addr %s917, 16
        %s919 = scalar_lea.vmem [#allocation11], %s918
        // Predicated region
        $region53: #{tpu_custom_call.1} parent=35 // pred_check
          %p920 = pneg %p172
        $region54: #{tpu_custom_call.1} parent=35 // pred_check_branch
          %922 = sbr.rel (%p920) target = $region56
        $region55: #{tpu_custom_call.1} parent=35 // pred_region
          %s924 = ssub.s32 128, 128
          %925 = vsyncadd %s911, %s924
          %s926 = sadd.s32 %s37, %s36
          %s927 = smul.addr %s926, 128
          %s928 = scalar_lea.hbm %s4, %s927
          %s930 = sshll.u32 %s914, 4
          %s931 = int_to_ptr.vmem [resolvable:$true] %s930
          %933 = dma.vmem_to_hbm [thread:$0]  %s931, 128, %s928, %s911
        $region56: #{tpu_custom_call.1} parent=35 // pred_fallthru
          _
        // Predicated region
        $region57: #{tpu_custom_call.1} parent=35 // pred_check
          %p934 = pneg %p200
        $region58: #{tpu_custom_call.1} parent=35 // pred_check_branch
          %936 = sbr.rel (%p934) target = $region60
        $region59: #{tpu_custom_call.1} parent=35 // pred_region
          %s937 = smul.u32 4, %s36
          %s939 = ssub.s32 256, 256
          %940 = vsyncadd %s916, %s939
          %s941 = sadd.s32 %s37, %s937
          %s942 = smul.addr %s941, 64
          %s943 = scalar_lea.hbm %s5, %s942
          %s944 = sshll.u32 %s919, 4
          %s945 = int_to_ptr.vmem [resolvable:$true] %s944
          %950 = dma.vmem_to_hbm [thread:$0]  %s945, 256, %s943, %s916, 64, 64, 4
        $region60: #{tpu_custom_call.1} parent=35 // pred_fallthru
          _
      $region36: #{tpu_custom_call.1} parent=5 // pred_fallthru
        _
      %p951 = scmp.le.s32.totalorder 2, %s27
      // Predicated region
      $region61: #{tpu_custom_call.1} parent=5 // pred_check
        %p952 = pneg %p951
      $region62: #{tpu_custom_call.1} parent=5 // pred_check_branch
        %954 = sbr.rel (%p952) target = $region64
      $region63: #{tpu_custom_call.1} parent=5 // pred_region
        %s955 = ssub.s32 %s27, 2
        // Predicated region
        $region65: #{tpu_custom_call.1} parent=63 // pred_check
          %p956 = pneg %p178
        $region66: #{tpu_custom_call.1} parent=63 // pred_check_branch
          %958 = sbr.rel (%p956) target = $region68
        $region67: #{tpu_custom_call.1} parent=63 // pred_region
          %s959 = sand.u32 %s163, 1
          %s960 = scalar_lea.sflag [#allocation4], %s959
          %s961 = sand.u32 %s163, 1
          %s962 = smul.addr %s961, 8
          %s963 = scalar_lea.vmem [#allocation10], %s962
          %964 = dma.done %s960, 128
        $region68: #{tpu_custom_call.1} parent=63 // pred_fallthru
          _
        // Predicated region
        $region69: #{tpu_custom_call.1} parent=63 // pred_check
          %p965 = pneg %p206
        $region70: #{tpu_custom_call.1} parent=63 // pred_check_branch
          %967 = sbr.rel (%p965) target = $region72
        $region71: #{tpu_custom_call.1} parent=63 // pred_region
          %s968 = sand.u32 %s191, 1
          %s969 = scalar_lea.sflag [#allocation12], %s968
          %s970 = sand.u32 %s191, 1
          %s971 = smul.addr %s970, 16
          %s972 = scalar_lea.vmem [#allocation11], %s971
          %973 = dma.done %s969, 256
        $region72: #{tpu_custom_call.1} parent=63 // pred_fallthru
          _
      $region64: #{tpu_custom_call.1} parent=5 // pred_fallthru
        _
    $region6: #{tpu_custom_call.1} parent=1 // loop_footer
      %s31 = sadd.s32 1, %s27
    $region7: #{tpu_custom_call.1} parent=1 // loop_footer_branch
      %26 = sbr.rel target = $region3
    $region8: #{tpu_custom_call.1} parent=1 // loop_exit
      _
    %974 = vsyncpa [#allocation3], 1
    %s975 = scalar_lea.sflag [#allocation3], 1
    %976 = vsyncpa %s975, 1
    %977 = vsyncpa [#allocation6], 1
    %s978 = scalar_lea.sflag [#allocation6], 1
    %979 = vsyncpa %s978, 1
    %980 = vsyncpa [#allocation9], 1
    %s981 = scalar_lea.sflag [#allocation9], 1
    %982 = vsyncpa %s981, 1
    %983 = vsyncpa [#allocation4], 1
    %s984 = scalar_lea.sflag [#allocation4], 1
    %985 = vsyncpa %s984, 1
    %986 = vsyncpa [#allocation12], 1
    %s987 = scalar_lea.sflag [#allocation12], 1
    %988 = vsyncpa %s987, 1

</llo_original>
